<compile_context>
chip_gen: v5e
topology: v5e:2x2
jax: 0.10.0
libtpu: 0.0.40
codegen_flags: <defaults>
</compile_context>

<pallas_src>
import functools

import jax
import jax.numpy as jnp
from jax.experimental import pallas as pl
from jax.experimental.pallas import tpu as pltpu


def _round_up(n, m):
    return ((n + m - 1) // m) * m


def _vmem_budgets():
    """Per-generation VMEM budgets (bytes): fused working set, two-pass working
    set, and the explicit vmem_limit_bytes passed to the compiler."""
    vmem_bytes = 64 * 1024 * 1024                    # conservative default (v7x)
    try:
        info = pltpu.get_tpu_info()
        vmem_bytes = int(getattr(info, "vmem_capacity_bytes", vmem_bytes))
    except Exception:
        pass
    if vmem_bytes >= 128 * 1024 * 1024:              # v5e / v6e: 128 MiB VMEM
        return {"fused": 96 << 20, "two_pass": 80 << 20, "limit": 100 << 20}
    return {"fused": 40 << 20, "two_pass": 32 << 20, "limit": 48 << 20}


def _pick_batch_block(batch, per_batch_work_bytes, per_batch_block_bytes, budget):
    """Pick batch block Bt (divisor of `batch`) for the fused path.

    `per_batch_work_bytes` is the per-unit-Bt working set per grid step
    (double-buffered in + out, plus f32-widening head-room for sub-f32 dtypes).
    Prefers blocks >= ~1 MiB (amortize ~0.35us/step overhead) and ~8 grid steps
    (4 per v7x TensorCore) so the DMA pipeline stays busy.  Returns None when
    even Bt=1 does not fit (caller falls back to the two-pass path)."""
    fitting = [bt for bt in range(1, batch + 1)
               if batch % bt == 0 and bt * per_batch_work_bytes <= budget]
    if not fitting:
        return None
    min_block_bytes = 1 << 20
    target_steps = 8
    best_bt, best_key = None, None
    for bt in fitting:
        steps = batch // bt
        key = (
            bt * per_batch_block_bytes >= min_block_bytes or bt == fitting[-1],
            steps >= 2 or batch == 1,            # keep both v7x TCs busy
            -abs(steps - target_steps),
            bt,
        )
        if best_key is None or key > best_key:
            best_bt, best_key = bt, key
    return best_bt


def _pick_channel_block(batch, c, per_channel_work_bytes, budget):
    """Pick channel block Ct (divisor of C, Ct == C or Ct % 8 == 0) for the
    two-pass path so each (1, Ct, HW) block fits the budget.  For B == 1 prefer
    >= 2 channel blocks so both v7x TensorCores get work."""
    divs = [d for d in range(1, c + 1) if c % d == 0]
    fitting = [d for d in divs
               if (d == c or d % 8 == 0) and d * per_channel_work_bytes <= budget]
    if fitting:
        if batch == 1:
            multi = [d for d in fitting if c // d >= 2]
            if multi:
                return max(multi)
        return max(fitting)
    aligned = [d for d in divs if d % 8 == 0]
    return min(aligned) if aligned else c        # pathological; rely on vmem_limit


# ---------------------------------------------------------------------------
# Fused single-pass kernel: one (Bt, C, HW) slab per grid step.
# ---------------------------------------------------------------------------
def _eca_fused_kernel(x_ref, w_ref, o_ref, *, k_size, pad, inv_hw):
    # x_ref: (Bt, C, HW) VMEM; w_ref: (k_size,) SMEM; o_ref: (Bt, C, HW) VMEM.
    # Global average pool: accumulate in f32, C stays on the sublane axis.
    y = jnp.sum(x_ref[...].astype(jnp.float32), axis=2, keepdims=True) * inv_hw
    bt, c = y.shape[0], y.shape[1]

    # Zero-padded 1D conv across the channel (sublane) axis; weights are SMEM
    # scalars feeding the VPU multiply directly (cross-correlation == Conv1d).
    if pad > 0:
        zeros = jnp.zeros((bt, pad, 1), dtype=jnp.float32)
        ypad = jnp.concatenate([zeros, y, zeros], axis=1)    # (Bt, C + 2*pad, 1)
    else:
        ypad = y
    conv = jnp.zeros_like(y)
    for j in range(k_size):                                  # tiny static unroll
        conv = conv + w_ref[j] * ypad[:, j:j + c, :]

    # Cast the gate to the input dtype so the big multiply runs in the input
    # dtype (no f32 widening of the whole slab for bf16 inputs).
    gate = jax.nn.sigmoid(conv).astype(x_ref.dtype)          # (Bt, C, 1)
    o_ref[...] = (x_ref[...] * gate).astype(o_ref.dtype)


def _eca_fused(x_flat, w, k_size, pad, hw, bt, vmem_limit):
    b, c, _ = x_flat.shape
    itemsize = x_flat.dtype.itemsize
    grid = (b // bt,)

    kernel = functools.partial(
        _eca_fused_kernel, k_size=k_size, pad=pad, inv_hw=1.0 / hw)

    return pl.pallas_call(
        kernel,
        out_shape=jax.ShapeDtypeStruct((b, c, hw), x_flat.dtype),
        grid_spec=pltpu.PrefetchScalarGridSpec(
            num_scalar_prefetch=0,
            grid=grid,
            in_specs=[
                # Last two block dims equal the full array dims -> exempt from
                # the (8,128) rule; no HBM-side padding needed.
                pl.BlockSpec((bt, c, hw), lambda i: (i, 0, 0)),
                # Tiny conv weight lives in SMEM (scalar reads, no padded vreg).
                pl.BlockSpec(memory_space=pltpu.MemorySpace.SMEM),
            ],
            out_specs=pl.BlockSpec((bt, c, hw), lambda i: (i, 0, 0)),
        ),
        compiler_params=pltpu.CompilerParams(
            dimension_semantics=("parallel",),
            vmem_limit_bytes=vmem_limit),
        cost_estimate=pl.CostEstimate(
            flops=2 * b * c * hw,
            transcendentals=b * c,
            bytes_accessed=2 * b * c * hw * itemsize),
    )(x_flat, w)


# ---------------------------------------------------------------------------
# Two-pass fallback (channel-tiled, full HW per block, no padding).
# ---------------------------------------------------------------------------
def _pool_kernel(x_ref, s_ref):
    # x_ref: (1, Ct, HW); s_ref: (1, Ct, 1) f32.  Each block fully reduces its
    # own HW extent — no cross-step accumulator, both grid axes parallel.
    s_ref[...] = jnp.sum(x_ref[...].astype(jnp.float32), axis=2, keepdims=True)


def _scale_kernel(x_ref, g_ref, o_ref):
    # x_ref: (1, Ct, HW); g_ref: (1, Ct, 1) f32; o_ref: (1, Ct, HW).
    o_ref[...] = (x_ref[...] * g_ref[...].astype(x_ref.dtype)).astype(o_ref.dtype)


def _eca_two_pass(x_flat, w, k_size, pad, hw, work_budget, vmem_limit):
    b, c, _ = x_flat.shape
    dtype = x_flat.dtype
    itemsize = dtype.itemsize
    hw_pad = _round_up(hw, 128)

    # Per-channel working set of the scale pass (double-buffered in + out).
    per_channel_work = 4 * hw_pad * itemsize + (hw_pad * 4 if itemsize < 4 else 0)
    ct = _pick_channel_block(b, c, per_channel_work, work_budget)
    n_cblk = c // ct

    # Pass 1: per-(batch, channel) spatial sums.
    sums = pl.pallas_call(
        _pool_kernel,
        out_shape=jax.ShapeDtypeStruct((b, c, 1), jnp.float32),
        grid_spec=pltpu.PrefetchScalarGridSpec(
            num_scalar_prefetch=0,
            grid=(b, n_cblk),
            in_specs=[pl.BlockSpec((1, ct, hw), lambda i, j: (i, j, 0))],
            out_specs=pl.BlockSpec((1, ct, 1), lambda i, j: (i, j, 0)),
        ),
        compiler_params=pltpu.CompilerParams(
            dimension_semantics=("parallel", "parallel"),
            vmem_limit_bytes=vmem_limit),
        cost_estimate=pl.CostEstimate(
            flops=b * c * hw,
            transcendentals=0,
            bytes_accessed=b * c * hw * itemsize),
    )(x_flat)

    # Tiny per-channel conv + sigmoid in plain JAX (only B*C elements).
    y = sums[:, :, 0] * (1.0 / hw)                               # (B, C) f32
    ypad = jnp.pad(y, ((0, 0), (pad, pad)))
    conv = sum(w[j] * ypad[:, j:j + c] for j in range(k_size))
    gate = jax.nn.sigmoid(conv)[:, :, None]                      # (B, C, 1) f32

    # Pass 2: scale x by the per-channel gate (same channel tiling, full HW).
    out = pl.pallas_call(
        _scale_kernel,
        out_shape=jax.ShapeDtypeStruct((b, c, hw), dtype),
        grid_spec=pltpu.PrefetchScalarGridSpec(
            num_scalar_prefetch=0,
            grid=(b, n_cblk),
            in_specs=[pl.BlockSpec((1, ct, hw), lambda i, j: (i, j, 0)),
                      pl.BlockSpec((1, ct, 1), lambda i, j: (i, j, 0))],
            out_specs=pl.BlockSpec((1, ct, hw), lambda i, j: (i, j, 0)),
        ),
        compiler_params=pltpu.CompilerParams(
            dimension_semantics=("parallel", "parallel"),
            vmem_limit_bytes=vmem_limit),
        cost_estimate=pl.CostEstimate(
            flops=b * c * hw,
            transcendentals=0,
            bytes_accessed=2 * b * c * hw * itemsize),
    )(x_flat, gate)

    return out


# ---------------------------------------------------------------------------
# Public wrapper
# ---------------------------------------------------------------------------
def eca_forward(x, weight, k_size=3, force_two_pass=False):
    """x: (B, C, H, W); weight: (k_size,) (Conv1d weight squeezed).  Any float
    dtype; pooling / conv / sigmoid run in f32, the big x slabs stay in x.dtype."""
    b, c, h, w = x.shape
    hw = h * w
    pad = (k_size - 1) // 2
    itemsize = x.dtype.itemsize

    x_flat = x.reshape(b, c, hw)
    w_flat = jnp.asarray(weight).reshape(k_size).astype(jnp.float32)

    budgets = _vmem_budgets()

    # VMEM accounting uses (8,128)-rounded tile sizes, but the array itself is
    # never padded (full-dim last blocks are exempt from the (8,128) rule).
    c_pad = _round_up(c, 8)
    hw_pad = _round_up(hw, 128)
    per_batch_block = c_pad * hw_pad * itemsize
    f32_copy = c_pad * hw_pad * 4 if itemsize < 4 else 0   # possible widening
    per_batch_work = 4 * per_batch_block + f32_copy

    bt = None
    if not force_two_pass:
        bt = _pick_batch_block(b, per_batch_work, per_batch_block, budgets["fused"])

    if bt is not None:
        out_flat = _eca_fused(x_flat, w_flat, k_size, pad, hw, bt, budgets["limit"])
    else:
        out_flat = _eca_two_pass(x_flat, w_flat, k_size, pad, hw,
                                 budgets["two_pass"], budgets["limit"])

    return out_flat.reshape(b, c, h, w)


def eca_reference(x, weight, k_size=3):
    """Plain-JAX reference matching the PyTorch module for validation."""
    pad = (k_size - 1) // 2
    y = jnp.mean(x.astype(jnp.float32), axis=(2, 3))          # (B, C)
    ypad = jnp.pad(y, ((0, 0), (pad, pad)))
    c = x.shape[1]
    conv = sum(weight[j] * ypad[:, j:j + c] for j in range(k_size))
    gate = jax.nn.sigmoid(conv)                               # (B, C)
    return (x * gate[:, :, None, None]).astype(x.dtype)


if __name__ == "__main__":
    key = jax.random.PRNGKey(0)
    kx, kw, kx2, kx3 = jax.random.split(key, 4)

    k_size = 3
    weight = jax.random.normal(kw, (k_size,), dtype=jnp.float32) * 0.5

    # 1) Fused single-pass path, lane-aligned HW (16*16 = 256).
    x1 = jax.random.normal(kx, (2, 4, 16, 16), dtype=jnp.float32)
    ref1 = eca_reference(x1, weight, k_size=k_size)
    out1 = jax.block_until_ready(eca_forward(x1, weight, k_size=k_size))
    assert out1.shape == x1.shape
    assert jnp.allclose(out1, ref1, atol=1e-5, rtol=1e-5), "fused (aligned hw) mismatch"

    # 2) Forced two-pass channel-tiled path on the same input.
    out2 = jax.block_until_ready(
        eca_forward(x1, weight, k_size=k_size, force_two_pass=True))
    assert jnp.allclose(out2, ref1, atol=1e-5, rtol=1e-5), "two-pass path mismatch"

    # 3) Fused path with HW not a multiple of 128 (7*7 = 49): full-dim last
    #    block, no HBM-side padding or output slice.
    x2 = jax.random.normal(kx2, (2, 16, 7, 7), dtype=jnp.float32)
    ref3 = eca_reference(x2, weight, k_size=k_size)
    out3 = jax.block_until_ready(eca_forward(x2, weight, k_size=k_size))
    assert jnp.allclose(out3, ref3, atol=1e-5, rtol=1e-5), "fused (odd hw) mismatch"

    # 4) bf16 input: final multiply runs in the input dtype (gate cast).
    x3 = jax.random.normal(kx3, (2, 8, 7, 7), dtype=jnp.float32).astype(jnp.bfloat16)
    ref4 = eca_reference(x3, weight, k_size=k_size)
    out4 = jax.block_until_ready(eca_forward(x3, weight, k_size=k_size))
    assert jnp.allclose(out4.astype(jnp.float32), ref4.astype(jnp.float32),
                        atol=2e-2, rtol=2e-2), "fused (bf16) mismatch"

    print("KERNEL_OK")
</pallas_src>

<mosaic_0001>
module attributes {stable_mosaic.version = 11 : i64} {
  func.func @_eca_fused_kernel(%arg0: i32, %arg1: memref<2x4x256xf32, #tpu.memory_space<vmem>>, %arg2: memref<3xf32, #tpu.memory_space<smem>>, %arg3: memref<2x4x256xf32, #tpu.memory_space<vmem>>) attributes {dimension_semantics = [#tpu.dimension_semantics<parallel>], iteration_bounds = array<i64: 1>, scalar_prefetch = 0 : i64, scratch_operands = 0 : i64, tpu.core_type = #tpu.core_type<tc>, window_params = [{transform_indices = @transform_0, window_bounds = array<i64: 2, 4, 256>}, {transform_indices = @transform_1, window_bounds = array<i64: 3>}, {transform_indices = @transform_2, window_bounds = array<i64: 2, 4, 256>}]} {
    %c0 = arith.constant 0 : index
    %c0_0 = arith.constant 0 : index
    %c0_1 = arith.constant 0 : index
    %0 = vector.load %arg1[%c0, %c0_0, %c0_1] : memref<2x4x256xf32, #tpu.memory_space<vmem>>, vector<2x4x256xf32>
    %cst = arith.constant dense<0.000000e+00> : vector<2x4xf32>
    %1 = vector.multi_reduction <add>, %0, %cst [2] : vector<2x4x256xf32> to vector<2x4xf32>
    %2 = vector.shape_cast %1 : vector<2x4xf32> to vector<2x4x1xf32>
    %cst_2 = arith.constant 3.906250e-03 : f32
    %3 = vector.broadcast %cst_2 : f32 to vector<2x4x1xf32>
    %4 = arith.mulf %2, %3 : vector<2x4x1xf32>
    %cst_3 = arith.constant 0.000000e+00 : f32
    %5 = vector.broadcast %cst_3 : f32 to vector<2x1x1xf32>
    %6 = tpu.concatenate %5, %4, %5 in 1 : vector<2x1x1xf32>, vector<2x4x1xf32>, vector<2x1x1xf32> -> vector<2x6x1xf32>
    %cst_4 = arith.constant 0.000000e+00 : f32
    %7 = vector.broadcast %cst_4 : f32 to vector<2x4x1xf32>
    %c0_5 = arith.constant 0 : index
    %8 = memref.load %arg2[%c0_5] : memref<3xf32, #tpu.memory_space<smem>>
    %9 = vector.extract_strided_slice %6 {offsets = [0, 0, 0], sizes = [2, 4, 1], strides = [1, 1, 1]} : vector<2x6x1xf32> to vector<2x4x1xf32>
    %10 = vector.broadcast %8 : f32 to vector<2x4x1xf32>
    %11 = arith.mulf %10, %9 : vector<2x4x1xf32>
    %12 = arith.addf %7, %11 : vector<2x4x1xf32>
    %c1 = arith.constant 1 : index
    %13 = memref.load %arg2[%c1] : memref<3xf32, #tpu.memory_space<smem>>
    %14 = vector.extract_strided_slice %6 {offsets = [0, 1, 0], sizes = [2, 4, 1], strides = [1, 1, 1]} : vector<2x6x1xf32> to vector<2x4x1xf32>
    %15 = vector.broadcast %13 : f32 to vector<2x4x1xf32>
    %16 = arith.mulf %15, %14 : vector<2x4x1xf32>
    %17 = arith.addf %12, %16 : vector<2x4x1xf32>
    %c2 = arith.constant 2 : index
    %18 = memref.load %arg2[%c2] : memref<3xf32, #tpu.memory_space<smem>>
    %19 = vector.extract_strided_slice %6 {offsets = [0, 2, 0], sizes = [2, 4, 1], strides = [1, 1, 1]} : vector<2x6x1xf32> to vector<2x4x1xf32>
    %20 = vector.broadcast %18 : f32 to vector<2x4x1xf32>
    %21 = arith.mulf %20, %19 : vector<2x4x1xf32>
    %22 = arith.addf %17, %21 : vector<2x4x1xf32>
    %23 = arith.negf %22 : vector<2x4x1xf32>
    %24 = math.exp %23 : vector<2x4x1xf32>
    %cst_6 = arith.constant 1.000000e+00 : f32
    %25 = vector.broadcast %cst_6 : f32 to vector<2x4x1xf32>
    %26 = arith.addf %25, %24 : vector<2x4x1xf32>
    %27 = arith.divf %25, %26 : vector<2x4x1xf32>
    %c0_7 = arith.constant 0 : index
    %c0_8 = arith.constant 0 : index
    %c0_9 = arith.constant 0 : index
    %28 = vector.load %arg1[%c0_7, %c0_8, %c0_9] : memref<2x4x256xf32, #tpu.memory_space<vmem>>, vector<2x4x256xf32>
    %29 = vector.broadcast %27 : vector<2x4x1xf32> to vector<2x4x256xf32>
    %30 = arith.mulf %28, %29 : vector<2x4x256xf32>
    %c0_10 = arith.constant 0 : index
    %c0_11 = arith.constant 0 : index
    %c0_12 = arith.constant 0 : index
    %31 = vector.load %arg3[%c0_10, %c0_11, %c0_12] : memref<2x4x256xf32, #tpu.memory_space<vmem>>, vector<2x4x256xf32>
    tpu.vector_store %arg3[%c0_10, %c0_11, %c0_12], %30 {strides = array<i32>} : memref<2x4x256xf32, #tpu.memory_space<vmem>>, vector<2x4x256xf32>,
    return
  }
  func.func @transform_0(%arg0: i32) -> (i32, i32, i32) {
    %c0_i32 = arith.constant 0 : i32
    %c0_i32_0 = arith.constant 0 : i32
    %c0_i32_1 = arith.constant 0 : i32
    return %arg0, %c0_i32, %c0_i32_0 : i32, i32, i32
  }
  func.func @transform_1(%arg0: i32) -> i32 {
    %c0_i32 = arith.constant 0 : i32
    %c0_i32_0 = arith.constant 0 : i32
    return %c0_i32 : i32
  }
  func.func @transform_2(%arg0: i32) -> (i32, i32, i32) {
    %c0_i32 = arith.constant 0 : i32
    %c0_i32_0 = arith.constant 0 : i32
    %c0_i32_1 = arith.constant 0 : i32
    return %arg0, %c0_i32, %c0_i32_0 : i32, i32, i32
  }
}

</mosaic_0001>

<llo_original>
// kernel: tpu_custom_call.1
$region0: #{tpu_custom_call.1}
  #allocation0 [shape = 'u32[]', space=smem, size = 0x4, offset = 0x4, fixed_abs, tag = 'smem constant byte address 0x4 - core index']
  #allocation1 [shape = 'u32[72,128]{1,0:T(1,128)}', space=vmem, size = 0x9000, scoped, tag = 'internal scratch']
  %s0 = inlined_call_operand.hbm [shape: f32[2,4,256], index: 0, kind: input, shape index: {}]
  %s1 = inlined_call_operand.hbm [shape: f32[3], index: 1, kind: input, shape index: {}]
  %s2 = inlined_call_operand.hbm [shape: f32[2,4,256], index: 2, kind: output, shape index: {}]
  %s3 = sld [smem:[#allocation0]]
  $region26: #{tpu_custom_call.1} parent=0
    _
  %s5 = ssub.s32 1, %s3
  %s6 = scalar_select 0, %s5, %s3
  $region1: #{tpu_custom_call.1} parent=0
    #allocation2 [shape = 'u8[8192]{0}', space=vmem, size = 0x2000, scoped, tag = 'input window, operand 0, single buffered']
    #allocation3 [shape = 's32[1]{0}', space=sflag, size = 0x4, scoped, tag = 'scoped memory for tpu_custom_call.1']
    #allocation4 [shape = 's32[1]{0}', space=sflag, size = 0x4, scoped, tag = 'scoped memory for tpu_custom_call.1']
    #allocation5 [shape = 's32[1]{0}', space=sflag, size = 0x4, scoped, tag = 'scoped memory for tpu_custom_call.1']
    #allocation6 [shape = 'u8[512]{0}', space=smem, size = 0x200, scoped, tag = 'input window, operand 1, single buffered']
    #allocation7 [shape = 'u8[8192]{0}', space=vmem, size = 0x2000, scoped, tag = 'output window, operand 0, single buffered']
    %7 = vsyncpa [#allocation3], 0
    %8 = vsyncpa [#allocation5], 0
    %9 = vsyncpa [#allocation4], 0
    // Predicated region
    $region2: #{tpu_custom_call.1} parent=1 // pred_check
      _
    $region3: #{tpu_custom_call.1} parent=1 // pred_check_branch
      %11 = sbr.rel (0) target = $region5
    $region4: #{tpu_custom_call.1} parent=1 // pred_region
      %13 = vsyncadd [#allocation3], 0
      %s14 = sshll.u32 %s0, 4
      %s15 = int_to_ptr.hbm [resolvable:$true] %s14
      %s16 = sshll.u32 [#allocation2], 4
      %s17 = int_to_ptr.vmem [resolvable:$true] %s16
      %22 = dma.hbm_to_vmem [thread:$0]  %s15, 256, %s17, [#allocation3], 128, 128, 8
    $region5: #{tpu_custom_call.1} parent=1 // pred_fallthru
      _
    // Predicated region
    $region6: #{tpu_custom_call.1} parent=1 // pred_check
      _
    $region7: #{tpu_custom_call.1} parent=1 // pred_check_branch
      %24 = sbr.rel (0) target = $region9
    $region8: #{tpu_custom_call.1} parent=1 // pred_region
      %26 = vsyncadd [#allocation5], 0
      %s28 = sshll.u32 %s1, 4
      %s29 = int_to_ptr.hbm [resolvable:$true] %s28
      %31 = dma.hbm_to_smem %s29, 16, [#allocation6], [#allocation5]
    $region9: #{tpu_custom_call.1} parent=1 // pred_fallthru
      _
    // Predicated region
    $region10: #{tpu_custom_call.1} parent=1 // pred_check
      _
    $region11: #{tpu_custom_call.1} parent=1 // pred_check_branch
      %33 = sbr.rel (0) target = $region13
    $region12: #{tpu_custom_call.1} parent=1 // pred_region
      %35 = dma.done [#allocation3], 256
    $region13: #{tpu_custom_call.1} parent=1 // pred_fallthru
      _
    // Predicated region
    $region14: #{tpu_custom_call.1} parent=1 // pred_check
      _
    $region15: #{tpu_custom_call.1} parent=1 // pred_check_branch
      %37 = sbr.rel (0) target = $region17
    $region16: #{tpu_custom_call.1} parent=1 // pred_region
      %39 = dma.done [#allocation5], 16
    $region17: #{tpu_custom_call.1} parent=1 // pred_fallthru
      _
    %40 = sfence
    %v41 = vld [vmem:[#allocation2] sm:$0xff]
    %v42 = vld [vmem:[#allocation2 + $0x8] sm:$0xff]
    %45 = vst [vmem:[#allocation1] ss:$2 sm:$0xff] %v41
    %v46 = vld.sshfl [vmem:[#allocation1] sm:$0xff pattern:$0x75316420]
    %v47 = vld.sshfl [vmem:[#allocation1 + $0x8] sm:$0xff pattern:$0x75316420]
    %s48 = scalar_lea.vmem [#allocation1], 16
    %49 = vst [vmem:[%s48] ss:$2 sm:$0xff] %v42
    %v50 = vld.sshfl [vmem:[#allocation1 + $0x10] sm:$0xff pattern:$0x75316420]
    %v51 = vld.sshfl [vmem:[#allocation1 + $0x18] sm:$0xff pattern:$0x75316420]
    %vm56 = vcmask 1043456
    %v57 = vsel %vm56, %v46, 0.0
    %v58 = vsel %vm56, %v47, 0.0
    %v59 = vadd.f32 %v57, %v58
    %60 = vadd.xlane.f32.xlu0 %v59
    %v61 = vpop.xlane.xlu0 %60
    %v62 = vsel %vm56, %v50, 0.0
    %v63 = vsel %vm56, %v51, 0.0
    %v64 = vadd.f32 %v62, %v63
    %65 = vadd.xlane.f32.xlu0 %v64
    %v66 = vpop.xlane.xlu0 %65
    %v67 = vmul.f32 %v61, 0.00390625
    %v68 = vmul.f32 %v66, 0.00390625
    %v71 = vrot.slane %v67, 7
    %v72 = vrot.slane %v68, 7
    %vm75 = vcmask 1040384
    %v76 = vsel %vm75, 0.0, %v71
    %v77 = vsel %vm75, 0.0, %v72
    %vm78 = vcmask 1044480
    %v79 = vsel %vm78, %v76, 0.0
    %v80 = vsel %vm78, %v77, 0.0
    %s81 = sld [smem:[#allocation6]]
    %v82 = vstv %s81
    %v83 = vmul.f32 %v82, %v79
    %v84 = vmul.f32 %v82, %v80
    %v85 = vadd.f32 %v83, 0.0
    %v86 = vadd.f32 %v84, 0.0
    %s87 = sld [smem:[#allocation6 + $0x1]]
    %v88 = vstv %s87
    %v89 = vmul.f32 %v88, %v79
    %v90 = vmul.f32 %v88, %v80
    %v93 = vrot.slane %v89, 1
    %v94 = vrot.slane %v90, 1
    %v97 = vadd.f32 %v85, %v93
    %v98 = vadd.f32 %v86, %v94
    %s99 = sld [smem:[#allocation6 + $0x2]]
    %v100 = vstv %s99
    %v101 = vmul.f32 %v100, %v79
    %v102 = vmul.f32 %v100, %v80
    %v105 = vrot.slane %v101, 2
    %v106 = vrot.slane %v102, 2
    %v109 = vadd.f32 %v97, %v105
    %v110 = vadd.f32 %v98, %v106
    %v111 = vxor.u32 %v109, 2147483648
    %v112 = vxor.u32 %v110, 2147483648
    %v113 = vmul.f32 %v111, 1.442695
    %v114 = vpow.pop %v113
    %v115 = vmul.f32 %v112, 1.442695
    %v116 = vpow.pop %v115
    %v117 = vadd.f32 %v114, 1.0
    %v118 = vadd.f32 %v116, 1.0
    %v119 = vrcp.pop %v117
    %v120 = vmul.f32 %v117, %v119
    %v121 = vsub.f32 1.0, %v120
    %v122 = vmul.f32 %v119, %v121
    %v123 = vadd.f32 %v119, %v122
    %vm124 = vweird.f32 %v117
    %vm125 = vweird.f32 %v119
    %vm126 = vmor %vm124, %vm125
    %v127 = vsel %vm126, %v119, %v123
    %v128 = vand.u32 2147483647, %v117
    %vm129 = vcmp.eq.f32.partialorder %v128, 8.507059e+37
    %v130 = vand.u32 %v117, 2147483648
    %v131 = vor.u32 1.1754944e-38, %v130
    %v132 = vsel %vm129, %v131, %v127
    %v133 = vmul.f32 1.0, %v132
    %v134 = vrcp.pop %v118
    %v135 = vmul.f32 %v118, %v134
    %v136 = vsub.f32 1.0, %v135
    %v137 = vmul.f32 %v134, %v136
    %v138 = vadd.f32 %v134, %v137
    %vm139 = vweird.f32 %v118
    %vm140 = vweird.f32 %v134
    %vm141 = vmor %vm139, %vm140
    %v142 = vsel %vm141, %v134, %v138
    %v143 = vand.u32 2147483647, %v118
    %vm144 = vcmp.eq.f32.partialorder %v143, 8.507059e+37
    %v145 = vand.u32 %v118, 2147483648
    %v146 = vor.u32 1.1754944e-38, %v145
    %v147 = vsel %vm144, %v146, %v142
    %v148 = vmul.f32 1.0, %v147
    %150 = vset.pattern.permute.xlu0 0
    %151 = vperm.xlu0 %150, %v133
    %v152 = vpop.permute.xlu0 %151
    %154 = vset.pattern.permute.xlu0 0
    %155 = vperm.xlu0 %154, %v148
    %v156 = vpop.permute.xlu0 %155
    %v158 = vunpack.c.l.s4 839922192
    %v159 = vunpack.c.0.s8 %v158
    %v160 = vperm.slane %v152, %v159
    %v162 = vunpack.c.l.s4 839922192
    %v163 = vunpack.c.0.s8 %v162
    %v164 = vperm.slane %v156, %v163
    %v167 = vmul.f32 %v41, %v160
    %v168 = vmul.f32 %v42, %v164
    %169 = vst [vmem:[#allocation7] sm:$0xff] %v167
    %170 = vst [vmem:[#allocation7 + $0x8] sm:$0xff] %v168
    // Predicated region
    $region18: #{tpu_custom_call.1} parent=1 // pred_check
      _
    $region19: #{tpu_custom_call.1} parent=1 // pred_check_branch
      %172 = sbr.rel (0) target = $region21
    $region20: #{tpu_custom_call.1} parent=1 // pred_region
      %174 = vsyncadd [#allocation4], 0
      %s175 = sshll.u32 [#allocation7], 4
      %s176 = int_to_ptr.vmem [resolvable:$true] %s175
      %s177 = sshll.u32 %s2, 4
      %s178 = int_to_ptr.hbm [resolvable:$true] %s177
      %183 = dma.vmem_to_hbm [thread:$0]  %s176, 256, %s178, [#allocation4], 128, 128, 8
    $region21: #{tpu_custom_call.1} parent=1 // pred_fallthru
      _
    // Predicated region
    $region22: #{tpu_custom_call.1} parent=1 // pred_check
      _
    $region23: #{tpu_custom_call.1} parent=1 // pred_check_branch
      %185 = sbr.rel (0) target = $region25
    $region24: #{tpu_custom_call.1} parent=1 // pred_region
      %187 = dma.done [#allocation4], 256
    $region25: #{tpu_custom_call.1} parent=1 // pred_fallthru
      _
    %188 = vsyncpa [#allocation3], 1
    %189 = vsyncpa [#allocation4], 1
    %190 = vsyncpa [#allocation5], 1

</llo_original>
